<compile_context>
chip_gen: v5e
topology: v5e:2x2
jax: 0.10.0
libtpu: 0.0.40
codegen_flags: <defaults>
</compile_context>

<pallas_src>
import math

import jax
import jax.numpy as jnp
from jax.experimental import pallas as pl
from jax.experimental.pallas import tpu as pltpu


def _round_up(n, m):
    return ((n + m - 1) // m) * m


def _nbytes(shape, dtype):
    return math.prod(shape) * jnp.dtype(dtype).itemsize


def _logits_kernel(x_ref, wa1_ref, ba1_ref, wa2_ref, ba2_ref,
                   wn_ref, wd_ref, b_ref, logits_ref):
    """One batch tile: unscaled fused logits (col 0 = p_normal, cols 1.. = p_disease)."""
    x_w = x_ref[...].astype(wa1_ref.dtype)   # LHS in weight dtype -> native MXU path
    x_f = x_ref[...].astype(jnp.float32)

    # --- attention branch: Linear -> ReLU -> Linear -> Sigmoid (f32 elementwise) ---
    h = jnp.dot(x_w, wa1_ref[...], preferred_element_type=jnp.float32)
    h = jnp.maximum(h + ba1_ref[...].astype(jnp.float32), 0.0)
    a = jnp.dot(h.astype(wa2_ref.dtype), wa2_ref[...],
                preferred_element_type=jnp.float32)
    att = 1.0 / (1.0 + jnp.exp(-(a + ba2_ref[...].astype(jnp.float32))))

    weighted = x_f * att                     # x * attention_weights

    # --- fc_disease on the MXU: wd_ref is (D, C) with col 0 zeroed, cols 1.. = Wd ---
    logits = jnp.dot(weighted.astype(wd_ref.dtype), wd_ref[...],
                     preferred_element_type=jnp.float32)
    logits = logits + b_ref[...].astype(jnp.float32)           # (TB, C)

    # --- fc_normal (single column) on the VPU/XLU instead of a padded MXU pass ---
    p_normal = jnp.sum(x_f * wn_ref[...].astype(jnp.float32),
                       axis=-1, keepdims=True)                  # (TB, 1)
    col = jax.lax.broadcasted_iota(jnp.int32, logits.shape, 1)
    logits = logits + p_normal * (col == 0).astype(jnp.float32)

    logits_ref[...] = logits.astype(logits_ref.dtype)


def _rescale_kernel(logits_ref, out_ref):
    """Batch-global mutual-restraint rescale over the full (B, C) unscaled logits."""
    logits = logits_ref[...].astype(jnp.float32)
    scores = 1.0 / (1.0 + jnp.exp(-logits))
    B, C = logits.shape
    col = jax.lax.broadcasted_iota(jnp.int32, (B, C), 1)
    is_normal = col == 0
    mean_normal = jnp.sum(jnp.where(is_normal, scores, 0.0)) / B
    mean_disease = jnp.sum(jnp.where(is_normal, 0.0, scores)) / (B * (C - 1))
    # p_normal scaled by 1 - mean(disease_scores); p_disease by 1 - mean(normal_score)
    scale = jnp.where(is_normal, 1.0 - mean_disease, 1.0 - mean_normal)
    out_ref[...] = (logits * scale).astype(out_ref.dtype)


def mutual_restraint_head(x, wn, bn, wd, bd, wa1, ba1, wa2, ba2,
                          *, weights_dtype=jnp.bfloat16, batch_tile=256):
    """x: (B, D). Linear weights stored as (in, out); biases as (1, out).
    Returns (B, num_classes) = concat([p_normal_out, p_disease_out], axis=1).

    weights_dtype: cast Wa1/Wa2/Wd to this dtype for the MXU (None = keep as given).
    batch_tile:    rows per grid step (weights stay resident across the grid).
    """
    B, D = x.shape
    Dh = wa1.shape[1]
    Cd = wd.shape[1]                  # num_classes - 1
    C = Cd + 1
    assert wn.shape == (D, 1) and bn.shape == (1, 1)
    assert wd.shape == (D, Cd) and bd.shape == (1, Cd)
    assert wa1.shape == (D, Dh) and ba1.shape == (1, Dh)
    assert wa2.shape == (Dh, D) and ba2.shape == (1, D)

    cast = (lambda w: w.astype(weights_dtype)) if weights_dtype is not None else (lambda w: w)
    wa1_k, wa2_k = cast(wa1), cast(wa2)
    # fc_disease padded to a lane-aligned (D, C) block (col 0 = 0, cols 1.. = Wd);
    # its bias fused with bn so stage 1 issues a single full-tile store.
    wd_cat = cast(jnp.pad(wd, ((0, 0), (1, 0))))
    b_cat = jnp.concatenate([bn, bd], axis=1).astype(jnp.float32)       # (1, C)
    wn_row = wn.reshape(1, D).astype(jnp.float32)   # fc_normal weight: f32, VPU side
    ba1_f = ba1.astype(jnp.float32)
    ba2_f = ba2.astype(jnp.float32)

    # --- batch tiling: pad B up to a multiple of the tile, slice back below ---
    TB = _round_up(min(int(batch_tile), _round_up(B, 8)), 8)
    B_pad = _round_up(B, TB)
    x_p = jnp.pad(x, ((0, B_pad - B), (0, 0))) if B_pad != B else x
    grid = (B_pad // TB,)

    # --- VMEM budget: resident weights (x2 for buffering) + streamed tiles + f32 scratch ---
    w_dt = wa1_k.dtype
    resident = (_nbytes((D, Dh), w_dt) + _nbytes((Dh, D), w_dt)
                + _nbytes((D, C), w_dt) + _nbytes((1, Dh), jnp.float32)
                + 2 * _nbytes((1, D), jnp.float32) + _nbytes((1, C), jnp.float32))
    per_tile_io = _nbytes((TB, D), x.dtype) + _nbytes((TB, C), jnp.float32)
    scratch = 4 * (TB * Dh + 4 * TB * D + 3 * TB * C)
    vmem_limit = min(int(2 * resident + 4 * per_tile_io + 2 * scratch) + (4 << 20),
                     128 << 20)

    cost = pl.CostEstimate(
        flops=int(2 * B_pad * (D * Dh + Dh * D + D * C + D)),
        transcendentals=int(B_pad * D),                       # attention sigmoid exps
        bytes_accessed=int(_nbytes((B_pad, D), x.dtype) + resident
                           + _nbytes((B_pad, C), jnp.float32)),
    )

    const2 = lambda i: (0, 0)
    logits = pl.pallas_call(
        _logits_kernel,
        out_shape=jax.ShapeDtypeStruct((B_pad, C), jnp.float32),
        grid=grid,
        in_specs=[
            pl.BlockSpec((TB, D), lambda i: (i, 0)),          # x: streamed / pipelined
            pl.BlockSpec((D, Dh), const2),                    # Wa1 (resident)
            pl.BlockSpec((1, Dh), const2),                    # ba1
            pl.BlockSpec((Dh, D), const2),                    # Wa2
            pl.BlockSpec((1, D), const2),                     # ba2
            pl.BlockSpec((1, D), const2),                     # wn (f32, VPU)
            pl.BlockSpec((D, C), const2),                     # Wd padded (col 0 = 0)
            pl.BlockSpec((1, C), const2),                     # [bn | bd]
        ],
        out_specs=pl.BlockSpec((TB, C), lambda i: (i, 0)),
        compiler_params=pltpu.CompilerParams(
            dimension_semantics=("parallel",),
            vmem_limit_bytes=vmem_limit),
        cost_estimate=cost,
    )(x_p, wa1_k, ba1_f, wa2_k, ba2_f, wn_row, wd_cat, b_cat)

    if B_pad != B:
        logits = logits[:B]

    # Stage 2: batch-global means + mutual-restraint rescale (tiny, all-VMEM).
    vmem = pl.BlockSpec(memory_space=pltpu.MemorySpace.VMEM)
    return pl.pallas_call(
        _rescale_kernel,
        out_shape=jax.ShapeDtypeStruct((B, C), x.dtype),
        in_specs=[vmem],
        out_specs=vmem,
    )(logits)


if __name__ == "__main__":
    # Small shapes consistent with the module: (B, in_features) -> (B, num_classes).
    # B=20 with batch_tile=16 exercises grid > 1 plus the padded-remainder path.
    B, D, C = 20, 128, 8
    Dh, Cd = D // 2, C - 1

    key = jax.random.PRNGKey(0)
    ks = jax.random.split(key, 9)
    x   = jax.random.normal(ks[0], (B, D), dtype=jnp.float32)
    wn  = jax.random.normal(ks[1], (D, 1),  dtype=jnp.float32) * 0.05
    bn  = jax.random.normal(ks[2], (1, 1),  dtype=jnp.float32) * 0.05
    wd  = jax.random.normal(ks[3], (D, Cd), dtype=jnp.float32) * 0.05
    bd  = jax.random.normal(ks[4], (1, Cd), dtype=jnp.float32) * 0.05
    wa1 = jax.random.normal(ks[5], (D, Dh), dtype=jnp.float32) * 0.05
    ba1 = jax.random.normal(ks[6], (1, Dh), dtype=jnp.float32) * 0.05
    wa2 = jax.random.normal(ks[7], (Dh, D), dtype=jnp.float32) * 0.05
    ba2 = jax.random.normal(ks[8], (1, D),  dtype=jnp.float32) * 0.05

    # Plain-JAX f32 reference replicating the PyTorch forward exactly.
    sig = lambda z: 1.0 / (1.0 + jnp.exp(-z))
    p_normal = x @ wn + bn
    att = sig(jnp.maximum(x @ wa1 + ba1, 0.0) @ wa2 + ba2)
    p_disease = (x * att) @ wd + bd
    normal_weight = 1.0 - sig(p_disease).mean()
    disease_weight = 1.0 - sig(p_normal).mean()
    ref = jnp.concatenate([p_normal * normal_weight,
                           p_disease * disease_weight], axis=1)

    args = (x, wn, bn, wd, bd, wa1, ba1, wa2, ba2)

    # Exact path: weights kept f32 -> tight tolerance against the reference.
    out_f32 = jax.block_until_ready(
        mutual_restraint_head(*args, weights_dtype=None, batch_tile=16))
    assert out_f32.shape == (B, C)
    err_f32 = float(jnp.max(jnp.abs(out_f32 - ref)))
    assert jnp.allclose(out_f32, ref, atol=5e-5, rtol=5e-5), err_f32

    # Fast path: bf16 weights on the MXU (f32 accumulation) -> looser tolerance.
    out_bf16 = jax.block_until_ready(
        mutual_restraint_head(*args, weights_dtype=jnp.bfloat16, batch_tile=16))
    assert out_bf16.shape == (B, C)
    err_bf16 = float(jnp.max(jnp.abs(out_bf16 - ref)))
    assert jnp.allclose(out_bf16, ref, atol=3e-2, rtol=3e-2), err_bf16

    print("KERNEL_OK")
</pallas_src>

<mosaic_0001>
module attributes {stable_mosaic.version = 11 : i64} {
  func.func @_logits_kernel(%arg0: i32, %arg1: memref<16x128xf32, #tpu.memory_space<vmem>>, %arg2: memref<128x64xf32, #tpu.memory_space<vmem>>, %arg3: memref<1x64xf32, #tpu.memory_space<vmem>>, %arg4: memref<64x128xf32, #tpu.memory_space<vmem>>, %arg5: memref<1x128xf32, #tpu.memory_space<vmem>>, %arg6: memref<1x128xf32, #tpu.memory_space<vmem>>, %arg7: memref<128x8xf32, #tpu.memory_space<vmem>>, %arg8: memref<1x8xf32, #tpu.memory_space<vmem>>, %arg9: memref<16x8xf32, #tpu.memory_space<vmem>>) attributes {dimension_semantics = [#tpu.dimension_semantics<parallel>], iteration_bounds = array<i64: 2>, scalar_prefetch = 0 : i64, scratch_operands = 0 : i64, tpu.core_type = #tpu.core_type<tc>, window_params = [{transform_indices = @transform_0, window_bounds = array<i64: 16, 128>}, {pipeline_mode = #tpu.pipeline_mode<synchronous>, transform_indices = @transform_1, window_bounds = array<i64: 128, 64>}, {pipeline_mode = #tpu.pipeline_mode<synchronous>, transform_indices = @transform_2, window_bounds = array<i64: 1, 64>}, {pipeline_mode = #tpu.pipeline_mode<synchronous>, transform_indices = @transform_3, window_bounds = array<i64: 64, 128>}, {pipeline_mode = #tpu.pipeline_mode<synchronous>, transform_indices = @transform_4, window_bounds = array<i64: 1, 128>}, {pipeline_mode = #tpu.pipeline_mode<synchronous>, transform_indices = @transform_5, window_bounds = array<i64: 1, 128>}, {pipeline_mode = #tpu.pipeline_mode<synchronous>, transform_indices = @transform_6, window_bounds = array<i64: 128, 8>}, {pipeline_mode = #tpu.pipeline_mode<synchronous>, transform_indices = @transform_7, window_bounds = array<i64: 1, 8>}, {transform_indices = @transform_8, window_bounds = array<i64: 16, 8>}]} {
    %c0 = arith.constant 0 : index
    %c0_0 = arith.constant 0 : index
    %0 = vector.load %arg1[%c0, %c0_0] : memref<16x128xf32, #tpu.memory_space<vmem>>, vector<16x128xf32>
    %c0_1 = arith.constant 0 : index
    %c0_2 = arith.constant 0 : index
    %1 = vector.load %arg1[%c0_1, %c0_2] : memref<16x128xf32, #tpu.memory_space<vmem>>, vector<16x128xf32>
    %c0_3 = arith.constant 0 : index
    %c0_4 = arith.constant 0 : index
    %2 = vector.load %arg2[%c0_3, %c0_4] : memref<128x64xf32, #tpu.memory_space<vmem>>, vector<128x64xf32>
    %cst = arith.constant dense<0.000000e+00> : vector<16x64xf32>
    %3 = tpu.matmul %0, %2, %cst {dimension_numbers = #tpu.dot_dimension_numbers<[1], [0], [0], [1], [0, 0, 1, 1], [], []>} : vector<16x128xf32>, vector<128x64xf32>, vector<16x64xf32> -> vector<16x64xf32>
    %c0_5 = arith.constant 0 : index
    %c0_6 = arith.constant 0 : index
    %4 = vector.load %arg3[%c0_5, %c0_6] : memref<1x64xf32, #tpu.memory_space<vmem>>, vector<1x64xf32>
    %5 = vector.broadcast %4 : vector<1x64xf32> to vector<16x64xf32>
    %6 = arith.addf %3, %5 : vector<16x64xf32>
    %cst_7 = arith.constant 0.000000e+00 : f32
    %7 = vector.broadcast %cst_7 : f32 to vector<16x64xf32>
    %8 = arith.maximumf %6, %7 : vector<16x64xf32>
    %c0_8 = arith.constant 0 : index
    %c0_9 = arith.constant 0 : index
    %9 = vector.load %arg4[%c0_8, %c0_9] : memref<64x128xf32, #tpu.memory_space<vmem>>, vector<64x128xf32>
    %cst_10 = arith.constant dense<0.000000e+00> : vector<16x128xf32>
    %10 = tpu.matmul %8, %9, %cst_10 {dimension_numbers = #tpu.dot_dimension_numbers<[1], [0], [0], [1], [0, 0, 1, 1], [], []>} : vector<16x64xf32>, vector<64x128xf32>, vector<16x128xf32> -> vector<16x128xf32>
    %c0_11 = arith.constant 0 : index
    %c0_12 = arith.constant 0 : index
    %11 = vector.load %arg5[%c0_11, %c0_12] : memref<1x128xf32, #tpu.memory_space<vmem>>, vector<1x128xf32>
    %12 = vector.broadcast %11 : vector<1x128xf32> to vector<16x128xf32>
    %13 = arith.addf %10, %12 : vector<16x128xf32>
    %cst_13 = arith.constant 0.000000e+00 : f32
    %14 = vector.broadcast %cst_13 : f32 to vector<16x128xf32>
    %15 = arith.subf %14, %13 : vector<16x128xf32>
    %16 = math.exp %15 : vector<16x128xf32>
    %cst_14 = arith.constant 1.000000e+00 : f32
    %17 = vector.broadcast %cst_14 : f32 to vector<16x128xf32>
    %18 = arith.addf %17, %16 : vector<16x128xf32>
    %cst_15 = arith.constant 1.000000e+00 : f32
    %19 = vector.broadcast %cst_15 : f32 to vector<16x128xf32>
    %20 = arith.divf %19, %18 : vector<16x128xf32>
    %21 = arith.mulf %1, %20 : vector<16x128xf32>
    %c0_16 = arith.constant 0 : index
    %c0_17 = arith.constant 0 : index
    %22 = vector.load %arg7[%c0_16, %c0_17] : memref<128x8xf32, #tpu.memory_space<vmem>>, vector<128x8xf32>
    %cst_18 = arith.constant dense<0.000000e+00> : vector<16x8xf32>
    %23 = tpu.matmul %21, %22, %cst_18 {dimension_numbers = #tpu.dot_dimension_numbers<[1], [0], [0], [1], [0, 0, 1, 1], [], []>} : vector<16x128xf32>, vector<128x8xf32>, vector<16x8xf32> -> vector<16x8xf32>
    %c0_19 = arith.constant 0 : index
    %c0_20 = arith.constant 0 : index
    %24 = vector.load %arg8[%c0_19, %c0_20] : memref<1x8xf32, #tpu.memory_space<vmem>>, vector<1x8xf32>
    %25 = vector.broadcast %24 : vector<1x8xf32> to vector<16x8xf32>
    %26 = arith.addf %23, %25 : vector<16x8xf32>
    %c0_21 = arith.constant 0 : index
    %c0_22 = arith.constant 0 : index
    %27 = vector.load %arg6[%c0_21, %c0_22] : memref<1x128xf32, #tpu.memory_space<vmem>>, vector<1x128xf32>
    %28 = vector.broadcast %27 : vector<1x128xf32> to vector<16x128xf32>
    %29 = arith.mulf %1, %28 : vector<16x128xf32>
    %cst_23 = arith.constant dense<0.000000e+00> : vector<16xf32>
    %30 = vector.multi_reduction <add>, %29, %cst_23 [1] : vector<16x128xf32> to vector<16xf32>
    %31 = vector.shape_cast %30 : vector<16xf32> to vector<16x1xf32>
    %32 = tpu.iota {dimensions = array<i32: 1>} : vector<16x8xi32>
    %c0_i32 = arith.constant 0 : i32
    %33 = vector.broadcast %c0_i32 : i32 to vector<16x8xi32>
    %34 = arith.cmpi eq, %32, %33 : vector<16x8xi32>
    %35 = arith.extui %34 : vector<16x8xi1> to vector<16x8xi32>
    %36 = arith.sitofp %35 : vector<16x8xi32> to vector<16x8xf32>
    %37 = vector.broadcast %31 : vector<16x1xf32> to vector<16x8xf32>
    %38 = arith.mulf %37, %36 : vector<16x8xf32>
    %39 = arith.addf %26, %38 : vector<16x8xf32>
    %c0_24 = arith.constant 0 : index
    %c0_25 = arith.constant 0 : index
    %40 = vector.load %arg9[%c0_24, %c0_25] : memref<16x8xf32, #tpu.memory_space<vmem>>, vector<16x8xf32>
    tpu.vector_store %arg9[%c0_24, %c0_25], %39 {strides = array<i32>} : memref<16x8xf32, #tpu.memory_space<vmem>>, vector<16x8xf32>,
    return
  }
  func.func @transform_0(%arg0: i32) -> (i32, i32) {
    %c0_i32 = arith.constant 0 : i32
    %c0_i32_0 = arith.constant 0 : i32
    return %arg0, %c0_i32 : i32, i32
  }
  func.func @transform_1(%arg0: i32) -> (i32, i32) {
    %c0_i32 = arith.constant 0 : i32
    %c0_i32_0 = arith.constant 0 : i32
    %c0_i32_1 = arith.constant 0 : i32
    return %c0_i32, %c0_i32_0 : i32, i32
  }
  func.func @transform_2(%arg0: i32) -> (i32, i32) {
    %c0_i32 = arith.constant 0 : i32
    %c0_i32_0 = arith.constant 0 : i32
    %c0_i32_1 = arith.constant 0 : i32
    return %c0_i32, %c0_i32_0 : i32, i32
  }
  func.func @transform_3(%arg0: i32) -> (i32, i32) {
    %c0_i32 = arith.constant 0 : i32
    %c0_i32_0 = arith.constant 0 : i32
    %c0_i32_1 = arith.constant 0 : i32
    return %c0_i32, %c0_i32_0 : i32, i32
  }
  func.func @transform_4(%arg0: i32) -> (i32, i32) {
    %c0_i32 = arith.constant 0 : i32
    %c0_i32_0 = arith.constant 0 : i32
    %c0_i32_1 = arith.constant 0 : i32
    return %c0_i32, %c0_i32_0 : i32, i32
  }
  func.func @transform_5(%arg0: i32) -> (i32, i32) {
    %c0_i32 = arith.constant 0 : i32
    %c0_i32_0 = arith.constant 0 : i32
    %c0_i32_1 = arith.constant 0 : i32
    return %c0_i32, %c0_i32_0 : i32, i32
  }
  func.func @transform_6(%arg0: i32) -> (i32, i32) {
    %c0_i32 = arith.constant 0 : i32
    %c0_i32_0 = arith.constant 0 : i32
    %c0_i32_1 = arith.constant 0 : i32
    return %c0_i32, %c0_i32_0 : i32, i32
  }
  func.func @transform_7(%arg0: i32) -> (i32, i32) {
    %c0_i32 = arith.constant 0 : i32
    %c0_i32_0 = arith.constant 0 : i32
    %c0_i32_1 = arith.constant 0 : i32
    return %c0_i32, %c0_i32_0 : i32, i32
  }
  func.func @transform_8(%arg0: i32) -> (i32, i32) {
    %c0_i32 = arith.constant 0 : i32
    %c0_i32_0 = arith.constant 0 : i32
    return %arg0, %c0_i32 : i32, i32
  }
}

</mosaic_0001>

<llo_original>
// kernel: tpu_custom_call.1
$region0: #{tpu_custom_call.1}
  #allocation0 [shape = 'u32[]', space=smem, size = 0x4, offset = 0x4, fixed_abs, tag = 'smem constant byte address 0x4 - core index']
  #allocation1 [shape = 'u32[72,128]{1,0:T(1,128)}', space=vmem, size = 0x9000, scoped, tag = 'internal scratch']
  %s0 = inlined_call_operand.vmem [shape: f32[32,128], index: 0, kind: input, shape index: {}]
  %s1 = inlined_call_operand.vmem [shape: f32[128,64], index: 1, kind: input, shape index: {}]
  %s2 = inlined_call_operand.vmem [shape: f32[1,64], index: 2, kind: input, shape index: {}]
  %s3 = inlined_call_operand.vmem [shape: f32[64,128], index: 3, kind: input, shape index: {}]
  %s4 = inlined_call_operand.vmem [shape: f32[1,128], index: 4, kind: input, shape index: {}]
  %s5 = inlined_call_operand.vmem [shape: f32[1,128], index: 5, kind: input, shape index: {}]
  %s6 = inlined_call_operand.vmem [shape: f32[128,8], index: 6, kind: input, shape index: {}]
  %s7 = inlined_call_operand.vmem [shape: f32[1,8], index: 7, kind: input, shape index: {}]
  %s8 = inlined_call_operand.vmem [shape: f32[32,8], index: 8, kind: output, shape index: {}]
  %s9 = sld [smem:[#allocation0]]
  $region65: #{tpu_custom_call.1} parent=0
    _
  %s11 = ssub.s32 1, %s9
  %s12 = scalar_select 0, %s11, %s9
  loop: start=0, step=1, limit=4
  $region2: #{tpu_custom_call.1} parent=0 // loop_pre_header
    _
  $region3: #{tpu_custom_call.1} parent=0 // loop_header
    %s14 = sphi 0, %s18
    %p15 = scmp.ge.s32.totalorder %s14, 4
    %s24 = sphi 0, %s26
    %s27 = sphi 0, %s24
    %s28 = sphi 0, %s27
    %s44 = sphi 0, %s28
    %s48 = sphi 0, %s48
    %s50 = sphi 0, %s48
    %s51 = sphi 0, %s50
    %s65 = sphi 0, %s51
    %s69 = sphi 0, %s69
    %s71 = sphi 0, %s69
    %s72 = sphi 0, %s71
    %s86 = sphi 0, %s72
    %s90 = sphi 0, %s90
    %s92 = sphi 0, %s90
    %s93 = sphi 0, %s92
    %s107 = sphi 0, %s93
    %s111 = sphi 0, %s111
    %s113 = sphi 0, %s111
    %s114 = sphi 0, %s113
    %s128 = sphi 0, %s114
    %s132 = sphi 0, %s132
    %s134 = sphi 0, %s132
    %s135 = sphi 0, %s134
    %s149 = sphi 0, %s135
    %s153 = sphi 0, %s153
    %s155 = sphi 0, %s153
    %s156 = sphi 0, %s155
    %s170 = sphi 0, %s156
    %s174 = sphi 0, %s174
    %s176 = sphi 0, %s174
    %s177 = sphi 0, %s176
    %s191 = sphi 0, %s177
    %s197 = sphi 0, %s199
    %s200 = sphi 0, %s197
    %s201 = sphi 0, %s200
    %s217 = sphi 0, %s201
  $region4: #{tpu_custom_call.1} parent=0 // loop_header_branch
    %17 = sbr.rel (%p15) target = $region8
  $region5: #{tpu_custom_call.1} parent=0 // loop_body
    %s19 = ssub.s32 %s14, 1
    %s20 = ssub.s32 %s14, 2
    %s21 = sadd.s32 %s14, 1
    %s22 = ssub.s32 %s14, %s21
    %p23 = scmp.eq.s32.totalorder %s22, 0
    %s25 = sadd.s32 %s24, 1
    %s26 = scalar_select %p23, %s24, %s25
    %p29 = pneg %p23
    %p30 = scmp.eq.s32.totalorder %s14, 1
    %p31 = por %p29, %p30
    %p32 = scmp.ne.s32.totalorder %s24, %s27
    %p33 = scmp.eq.s32.totalorder %s14, 0
    %p34 = por %p32, %p33
    %p35 = scmp.ne.s32.totalorder %s24, %s27
    %p36 = scmp.eq.s32.totalorder %s19, 1
    %p37 = por %p35, %p36
    %p38 = scmp.ne.s32.totalorder %s27, %s28
    %p39 = scmp.eq.s32.totalorder %s19, 0
    %p40 = por %p38, %p39
    %p41 = scmp.ne.s32.totalorder %s27, %s28
    %p42 = scmp.eq.s32.totalorder %s20, 1
    %p43 = por %p41, %p42
    %p45 = scmp.ne.s32.totalorder %s28, %s44
    %p46 = scmp.eq.s32.totalorder %s20, 0
    %p47 = por %p45, %p46
    %s49 = sadd.s32 %s48, 1
    %p52 = scmp.eq.s32.totalorder %s14, 1
    %p53 = scmp.ne.s32.totalorder %s48, %s50
    %p54 = scmp.eq.s32.totalorder %s14, 0
    %p55 = por %p53, %p54
    %p56 = scmp.ne.s32.totalorder %s48, %s50
    %p57 = scmp.eq.s32.totalorder %s19, 1
    %p58 = por %p56, %p57
    %p59 = scmp.ne.s32.totalorder %s50, %s51
    %p60 = scmp.eq.s32.totalorder %s19, 0
    %p61 = por %p59, %p60
    %p62 = scmp.ne.s32.totalorder %s50, %s51
    %p63 = scmp.eq.s32.totalorder %s20, 1
    %p64 = por %p62, %p63
    %p66 = scmp.ne.s32.totalorder %s51, %s65
    %p67 = scmp.eq.s32.totalorder %s20, 0
    %p68 = por %p66, %p67
    %s70 = sadd.s32 %s69, 1
    %p73 = scmp.eq.s32.totalorder %s14, 1
    %p74 = scmp.ne.s32.totalorder %s69, %s71
    %p75 = scmp.eq.s32.totalorder %s14, 0
    %p76 = por %p74, %p75
    %p77 = scmp.ne.s32.totalorder %s69, %s71
    %p78 = scmp.eq.s32.totalorder %s19, 1
    %p79 = por %p77, %p78
    %p80 = scmp.ne.s32.totalorder %s71, %s72
    %p81 = scmp.eq.s32.totalorder %s19, 0
    %p82 = por %p80, %p81
    %p83 = scmp.ne.s32.totalorder %s71, %s72
    %p84 = scmp.eq.s32.totalorder %s20, 1
    %p85 = por %p83, %p84
    %p87 = scmp.ne.s32.totalorder %s72, %s86
    %p88 = scmp.eq.s32.totalorder %s20, 0
    %p89 = por %p87, %p88
    %s91 = sadd.s32 %s90, 1
    %p94 = scmp.eq.s32.totalorder %s14, 1
    %p95 = scmp.ne.s32.totalorder %s90, %s92
    %p96 = scmp.eq.s32.totalorder %s14, 0
    %p97 = por %p95, %p96
    %p98 = scmp.ne.s32.totalorder %s90, %s92
    %p99 = scmp.eq.s32.totalorder %s19, 1
    %p100 = por %p98, %p99
    %p101 = scmp.ne.s32.totalorder %s92, %s93
    %p102 = scmp.eq.s32.totalorder %s19, 0
    %p103 = por %p101, %p102
    %p104 = scmp.ne.s32.totalorder %s92, %s93
    %p105 = scmp.eq.s32.totalorder %s20, 1
    %p106 = por %p104, %p105
    %p108 = scmp.ne.s32.totalorder %s93, %s107
    %p109 = scmp.eq.s32.totalorder %s20, 0
    %p110 = por %p108, %p109
    %s112 = sadd.s32 %s111, 1
    %p115 = scmp.eq.s32.totalorder %s14, 1
    %p116 = scmp.ne.s32.totalorder %s111, %s113
    %p117 = scmp.eq.s32.totalorder %s14, 0
    %p118 = por %p116, %p117
    %p119 = scmp.ne.s32.totalorder %s111, %s113
    %p120 = scmp.eq.s32.totalorder %s19, 1
    %p121 = por %p119, %p120
    %p122 = scmp.ne.s32.totalorder %s113, %s114
    %p123 = scmp.eq.s32.totalorder %s19, 0
    %p124 = por %p122, %p123
    %p125 = scmp.ne.s32.totalorder %s113, %s114
    %p126 = scmp.eq.s32.totalorder %s20, 1
    %p127 = por %p125, %p126
    %p129 = scmp.ne.s32.totalorder %s114, %s128
    %p130 = scmp.eq.s32.totalorder %s20, 0
    %p131 = por %p129, %p130
    %s133 = sadd.s32 %s132, 1
    %p136 = scmp.eq.s32.totalorder %s14, 1
    %p137 = scmp.ne.s32.totalorder %s132, %s134
    %p138 = scmp.eq.s32.totalorder %s14, 0
    %p139 = por %p137, %p138
    %p140 = scmp.ne.s32.totalorder %s132, %s134
    %p141 = scmp.eq.s32.totalorder %s19, 1
    %p142 = por %p140, %p141
    %p143 = scmp.ne.s32.totalorder %s134, %s135
    %p144 = scmp.eq.s32.totalorder %s19, 0
    %p145 = por %p143, %p144
    %p146 = scmp.ne.s32.totalorder %s134, %s135
    %p147 = scmp.eq.s32.totalorder %s20, 1
    %p148 = por %p146, %p147
    %p150 = scmp.ne.s32.totalorder %s135, %s149
    %p151 = scmp.eq.s32.totalorder %s20, 0
    %p152 = por %p150, %p151
    %s154 = sadd.s32 %s153, 1
    %p157 = scmp.eq.s32.totalorder %s14, 1
    %p158 = scmp.ne.s32.totalorder %s153, %s155
    %p159 = scmp.eq.s32.totalorder %s14, 0
    %p160 = por %p158, %p159
    %p161 = scmp.ne.s32.totalorder %s153, %s155
    %p162 = scmp.eq.s32.totalorder %s19, 1
    %p163 = por %p161, %p162
    %p164 = scmp.ne.s32.totalorder %s155, %s156
    %p165 = scmp.eq.s32.totalorder %s19, 0
    %p166 = por %p164, %p165
    %p167 = scmp.ne.s32.totalorder %s155, %s156
    %p168 = scmp.eq.s32.totalorder %s20, 1
    %p169 = por %p167, %p168
    %p171 = scmp.ne.s32.totalorder %s156, %s170
    %p172 = scmp.eq.s32.totalorder %s20, 0
    %p173 = por %p171, %p172
    %s175 = sadd.s32 %s174, 1
    %p178 = scmp.eq.s32.totalorder %s14, 1
    %p179 = scmp.ne.s32.totalorder %s174, %s176
    %p180 = scmp.eq.s32.totalorder %s14, 0
    %p181 = por %p179, %p180
    %p182 = scmp.ne.s32.totalorder %s174, %s176
    %p183 = scmp.eq.s32.totalorder %s19, 1
    %p184 = por %p182, %p183
    %p185 = scmp.ne.s32.totalorder %s176, %s177
    %p186 = scmp.eq.s32.totalorder %s19, 0
    %p187 = por %p185, %p186
    %p188 = scmp.ne.s32.totalorder %s176, %s177
    %p189 = scmp.eq.s32.totalorder %s20, 1
    %p190 = por %p188, %p189
    %p192 = scmp.ne.s32.totalorder %s177, %s191
    %p193 = scmp.eq.s32.totalorder %s20, 0
    %p194 = por %p192, %p193
    %s195 = ssub.s32 %s14, %s21
    %p196 = scmp.eq.s32.totalorder %s195, 0
    %s198 = sadd.s32 %s197, 1
    %s199 = scalar_select %p196, %s197, %s198
    %p202 = pneg %p196
    %p203 = scmp.eq.s32.totalorder %s14, 1
    %p204 = por %p202, %p203
    %p205 = scmp.ne.s32.totalorder %s197, %s200
    %p206 = scmp.eq.s32.totalorder %s14, 0
    %p207 = por %p205, %p206
    %p208 = scmp.ne.s32.totalorder %s197, %s200
    %p209 = scmp.eq.s32.totalorder %s19, 1
    %p210 = por %p208, %p209
    %p211 = scmp.ne.s32.totalorder %s200, %s201
    %p212 = scmp.eq.s32.totalorder %s19, 0
    %p213 = por %p211, %p212
    %p214 = scmp.ne.s32.totalorder %s200, %s201
    %p215 = scmp.eq.s32.totalorder %s20, 1
    %p216 = por %p214, %p215
    %p218 = scmp.ne.s32.totalorder %s201, %s217
    %p219 = scmp.eq.s32.totalorder %s20, 0
    %p220 = por %p218, %p219
    %p221 = scmp.le.s32.totalorder 1, %s14
    %p222 = scmp.lt.s32.totalorder %s14, 3
    %p223 = pnand %p221, %p222
    %p224 = pneg %p223
    // Predicated region
    $region9: #{tpu_custom_call.1} parent=5 // pred_check
      _
    $region10: #{tpu_custom_call.1} parent=5 // pred_check_branch
      %226 = sbr.rel (%p223) target = $region12
    $region11: #{tpu_custom_call.1} parent=5 // pred_region
      %s227 = ssub.s32 %s14, 1
      // Predicated region
      $region13: #{tpu_custom_call.1} parent=11 // pred_check
        %p228 = pneg %p61
      $region14: #{tpu_custom_call.1} parent=11 // pred_check_branch
        %230 = sbr.rel (%p228) target = $region16
      $region15: #{tpu_custom_call.1} parent=11 // pred_region
        _
      $region16: #{tpu_custom_call.1} parent=11 // pred_fallthru
        _
      // Predicated region
      $region17: #{tpu_custom_call.1} parent=11 // pred_check
        %p231 = pneg %p82
      $region18: #{tpu_custom_call.1} parent=11 // pred_check_branch
        %233 = sbr.rel (%p231) target = $region20
      $region19: #{tpu_custom_call.1} parent=11 // pred_region
        _
      $region20: #{tpu_custom_call.1} parent=11 // pred_fallthru
        _
      // Predicated region
      $region21: #{tpu_custom_call.1} parent=11 // pred_check
        %p234 = pneg %p103
      $region22: #{tpu_custom_call.1} parent=11 // pred_check_branch
        %236 = sbr.rel (%p234) target = $region24
      $region23: #{tpu_custom_call.1} parent=11 // pred_region
        _
      $region24: #{tpu_custom_call.1} parent=11 // pred_fallthru
        _
      // Predicated region
      $region25: #{tpu_custom_call.1} parent=11 // pred_check
        %p237 = pneg %p124
      $region26: #{tpu_custom_call.1} parent=11 // pred_check_branch
        %239 = sbr.rel (%p237) target = $region28
      $region27: #{tpu_custom_call.1} parent=11 // pred_region
        _
      $region28: #{tpu_custom_call.1} parent=11 // pred_fallthru
        _
      // Predicated region
      $region29: #{tpu_custom_call.1} parent=11 // pred_check
        %p240 = pneg %p145
      $region30: #{tpu_custom_call.1} parent=11 // pred_check_branch
        %242 = sbr.rel (%p240) target = $region32
      $region31: #{tpu_custom_call.1} parent=11 // pred_region
        _
      $region32: #{tpu_custom_call.1} parent=11 // pred_fallthru
        _
      // Predicated region
      $region33: #{tpu_custom_call.1} parent=11 // pred_check
        %p243 = pneg %p166
      $region34: #{tpu_custom_call.1} parent=11 // pred_check_branch
        %245 = sbr.rel (%p243) target = $region36
      $region35: #{tpu_custom_call.1} parent=11 // pred_region
        _
      $region36: #{tpu_custom_call.1} parent=11 // pred_fallthru
        _
      // Predicated region
      $region37: #{tpu_custom_call.1} parent=11 // pred_check
        %p246 = pneg %p187
      $region38: #{tpu_custom_call.1} parent=11 // pred_check_branch
        %248 = sbr.rel (%p246) target = $region40
      $region39: #{tpu_custom_call.1} parent=11 // pred_region
        _
      $region40: #{tpu_custom_call.1} parent=11 // pred_fallthru
        _
    $region12: #{tpu_custom_call.1} parent=5 // pred_fallthru
      _
    %p249 = scmp.lt.s32.totalorder %s14, 2
    // Predicated region
    $region41: #{tpu_custom_call.1} parent=5 // pred_check
      %p250 = pneg %p249
    $region42: #{tpu_custom_call.1} parent=5 // pred_check_branch
      %252 = sbr.rel (%p250) target = $region44
    $region43: #{tpu_custom_call.1} parent=5 // pred_region
      // Predicated region
      $region45: #{tpu_custom_call.1} parent=43 // pred_check
        %p253 = pneg %p34
      $region46: #{tpu_custom_call.1} parent=43 // pred_check_branch
        %255 = sbr.rel (%p253) target = $region48
      $region47: #{tpu_custom_call.1} parent=43 // pred_region
        %s256 = smul.u32 2, %s14
        %p257 = scmp.lt.s32.totalorder %s256, 3
        %s258 = scalar_select %p257, %s256, 3
        %s259 = smul.addr %s258, 8
        %s260 = scalar_lea.vmem %s0, %s259
        %s261 = smul.u32 2, %s14
      $region48: #{tpu_custom_call.1} parent=43 // pred_fallthru
        _
    $region44: #{tpu_custom_call.1} parent=5 // pred_fallthru
      _
    %p262 = scmp.le.s32.totalorder 1, %s14
    %p263 = scmp.lt.s32.totalorder %s14, 3
    %p264 = pnand %p262, %p263
    %p265 = pneg %p264
    // Predicated region
    $region49: #{tpu_custom_call.1} parent=5 // pred_check
      _
    $region50: #{tpu_custom_call.1} parent=5 // pred_check_branch
      %267 = sbr.rel (%p264) target = $region52
    $region51: #{tpu_custom_call.1} parent=5 // pred_region
      %s268 = ssub.s32 %s14, 1
      %s269 = smul.u32 2, %s19
      %p270 = scmp.lt.s32.totalorder %s269, 3
      %s271 = scalar_select %p270, %s269, 3
      %s272 = smul.addr %s271, 8
      %s273 = scalar_lea.vmem %s0, %s272
      %p274 = pneg %p40
      %p275 = pneg %p37
      %p276 = pneg %p61
      %p277 = pneg %p58
      %p278 = pneg %p82
      %p279 = pneg %p79
      %p280 = pneg %p103
      %p281 = pneg %p100
      %p282 = pneg %p124
      %p283 = pneg %p121
      %p284 = pneg %p145
      %p285 = pneg %p142
      %p286 = pneg %p166
      %p287 = pneg %p163
      %p288 = pneg %p187
      %p289 = pneg %p184
      %p290 = pneg %p213
      %p291 = pneg %p210
      %s292 = smul.u32 2, %s19
      %p293 = scmp.lt.s32.totalorder %s292, 3
      %s294 = scalar_select %p293, %s292, 3
      %s295 = smul.addr %s294, 8
      %s296 = scalar_lea.vmem %s8, %s295
      %s297 = smul.u32 2, %s19
      %p298 = scmp.lt.s32.totalorder %s297, 3
      %s299 = scalar_select %p298, %s297, 3
      %s300 = smul.addr %s299, 8
      %s301 = scalar_lea.vmem %s0, %s300
      %s302 = smul.u32 2, %s19
      %s303 = smul.u32 2, %s19
      %p304 = scmp.lt.s32.totalorder %s303, 3
      %s305 = scalar_select %p304, %s303, 3
      %s306 = smul.addr %s305, 8
      %s307 = scalar_lea.vmem %s8, %s306
      %s308 = smul.u32 2, %s19
      %v309 = vld [vmem:[%s301] sm:$0xff]
      %v310 = vld [vmem:[%s301 + $0x8] sm:$0xff]
      %v311 = vld [vmem:[%s1] sm:$0xff]
      %v312 = vld [vmem:[%s1 + $0x8] sm:$0xff]
      %v313 = vld [vmem:[%s1 + $0x10] sm:$0xff]
      %v314 = vld [vmem:[%s1 + $0x18] sm:$0xff]
      %v315 = vld [vmem:[%s1 + $0x20] sm:$0xff]
      %v316 = vld [vmem:[%s1 + $0x28] sm:$0xff]
      %v317 = vld [vmem:[%s1 + $0x30] sm:$0xff]
      %v318 = vld [vmem:[%s1 + $0x38] sm:$0xff]
      %v319 = vld [vmem:[%s1 + $0x40] sm:$0xff]
      %v320 = vld [vmem:[%s1 + $0x48] sm:$0xff]
      %v321 = vld [vmem:[%s1 + $0x50] sm:$0xff]
      %v322 = vld [vmem:[%s1 + $0x58] sm:$0xff]
      %v323 = vld [vmem:[%s1 + $0x60] sm:$0xff]
      %v324 = vld [vmem:[%s1 + $0x68] sm:$0xff]
      %v325 = vld [vmem:[%s1 + $0x70] sm:$0xff]
      %v326 = vld [vmem:[%s1 + $0x78] sm:$0xff]
      %v327 = vld [vmem:[%s2] sm:$0x1]
      %v329 = vperm.slane %v327, 0
      %331 = vmatpush.msra.mxu0 %v326
      %332 = vmatpush.msra.mxu0 %v325
      %333 = vmatpush.msra.mxu0 %v324
      %334 = vmatpush.msra.mxu0 %v323
      %335 = vmatpush.msra.mxu0 %v322
      %336 = vmatpush.msra.mxu0 %v321
      %337 = vmatpush.msra.mxu0 %v320
      %338 = vmatpush.msra.mxu0 %v319
      %339 = vmatpush.msra.mxu0 %v318
      %340 = vmatpush.msra.mxu0 %v317
      %341 = vmatpush.msra.mxu0 %v316
      %342 = vmatpush.msra.mxu0 %v315
      %343 = vmatpush.msra.mxu0 %v314
      %344 = vmatpush.msra.mxu0 %v313
      %345 = vmatpush.msra.mxu0 %v312
      %346 = vmatpush.msra.mxu0 %v311
      %347 = vmatmul.f32.gmra.mxu0 %v309
      %v348 = vpop.f32.mrf.mxu0
      %v349 = vadd.f32 %v329, %v348
      %350 = vmatmul.f32.gmra.mxu0 %v310
      %v351 = vpop.f32.mrf.mxu0
      %v352 = vadd.f32 %v329, %v351
      %353 = vdwg.mxu0
      %v354 = vmax.f32 %v349, 0.0
      %v355 = vmax.f32 %v352, 0.0
      %v356 = vld [vmem:[%s3] sm:$0xff]
      %v357 = vld [vmem:[%s3 + $0x8] sm:$0xff]
      %v358 = vld [vmem:[%s3 + $0x10] sm:$0xff]
      %v359 = vld [vmem:[%s3 + $0x18] sm:$0xff]
      %v360 = vld [vmem:[%s3 + $0x20] sm:$0xff]
      %v361 = vld [vmem:[%s3 + $0x28] sm:$0xff]
      %v362 = vld [vmem:[%s3 + $0x30] sm:$0xff]
      %v363 = vld [vmem:[%s3 + $0x38] sm:$0xff]
      %v364 = vld [vmem:[%s4] sm:$0x1]
      %v366 = vperm.slane %v364, 0
      %vm368 = vcmask 523264
      %v370 = vsel %vm368, %v354, 0
      %v373 = vsel %vm368, %v355, 0
      %375 = vmatpush.msra.mxu0 0.0
      %376 = vmatpush.msra.mxu0 0.0
      %377 = vmatpush.msra.mxu0 0.0
      %378 = vmatpush.msra.mxu0 0.0
      %379 = vmatpush.msra.mxu0 0.0
      %380 = vmatpush.msra.mxu0 0.0
      %381 = vmatpush.msra.mxu0 0.0
      %382 = vmatpush.msra.mxu0 0.0
      %383 = vmatpush.msra.mxu0 %v363
      %384 = vmatpush.msra.mxu0 %v362
      %385 = vmatpush.msra.mxu0 %v361
      %386 = vmatpush.msra.mxu0 %v360
      %387 = vmatpush.msra.mxu0 %v359
      %388 = vmatpush.msra.mxu0 %v358
      %389 = vmatpush.msra.mxu0 %v357
      %390 = vmatpush.msra.mxu0 %v356
      %391 = vmatmul.f32.gmra.mxu0 %v370
      %v392 = vpop.f32.mrf.mxu0
      %v393 = vadd.f32 %v366, %v392
      %394 = vmatmul.f32.gmra.mxu0 %v373
      %v395 = vpop.f32.mrf.mxu0
      %v396 = vadd.f32 %v366, %v395
      %397 = vdwg.mxu0
      %v398 = vsub.f32 0.0, %v393
      %v399 = vsub.f32 0.0, %v396
      %v400 = vmul.f32 %v398, 1.442695
      %v401 = vpow.pop %v400
      %v402 = vmul.f32 %v399, 1.442695
      %v403 = vpow.pop %v402
      %v404 = vadd.f32 %v401, 1.0
      %v405 = vadd.f32 %v403, 1.0
      %v406 = vrcp.pop %v404
      %v407 = vmul.f32 %v404, %v406
      %v408 = vsub.f32 1.0, %v407
      %v409 = vmul.f32 %v406, %v408
      %v410 = vadd.f32 %v406, %v409
      %vm411 = vweird.f32 %v404
      %vm412 = vweird.f32 %v406
      %vm413 = vmor %vm411, %vm412
      %v414 = vsel %vm413, %v406, %v410
      %v415 = vand.u32 2147483647, %v404
      %vm416 = vcmp.eq.f32.partialorder %v415, 8.507059e+37
      %v417 = vand.u32 %v404, 2147483648
      %v418 = vor.u32 1.1754944e-38, %v417
      %v419 = vsel %vm416, %v418, %v414
      %v420 = vmul.f32 1.0, %v419
      %v421 = vrcp.pop %v405
      %v422 = vmul.f32 %v405, %v421
      %v423 = vsub.f32 1.0, %v422
      %v424 = vmul.f32 %v421, %v423
      %v425 = vadd.f32 %v421, %v424
      %vm426 = vweird.f32 %v405
      %vm427 = vweird.f32 %v421
      %vm428 = vmor %vm426, %vm427
      %v429 = vsel %vm428, %v421, %v425
      %v430 = vand.u32 2147483647, %v405
      %vm431 = vcmp.eq.f32.partialorder %v430, 8.507059e+37
      %v432 = vand.u32 %v405, 2147483648
      %v433 = vor.u32 1.1754944e-38, %v432
      %v434 = vsel %vm431, %v433, %v429
      %v435 = vmul.f32 1.0, %v434
      %v436 = vmul.f32 %v309, %v420
      %v437 = vmul.f32 %v310, %v435
      %v438 = vld [vmem:[%s6] sm:$0xff]
      %v439 = vld [vmem:[%s6 + $0x8] sm:$0xff]
      %v440 = vld [vmem:[%s6 + $0x10] sm:$0xff]
      %v441 = vld [vmem:[%s6 + $0x18] sm:$0xff]
      %v442 = vld [vmem:[%s6 + $0x20] sm:$0xff]
      %v443 = vld [vmem:[%s6 + $0x28] sm:$0xff]
      %v444 = vld [vmem:[%s6 + $0x30] sm:$0xff]
      %v445 = vld [vmem:[%s6 + $0x38] sm:$0xff]
      %v446 = vld [vmem:[%s6 + $0x40] sm:$0xff]
      %v447 = vld [vmem:[%s6 + $0x48] sm:$0xff]
      %v448 = vld [vmem:[%s6 + $0x50] sm:$0xff]
      %v449 = vld [vmem:[%s6 + $0x58] sm:$0xff]
      %v450 = vld [vmem:[%s6 + $0x60] sm:$0xff]
      %v451 = vld [vmem:[%s6 + $0x68] sm:$0xff]
      %v452 = vld [vmem:[%s6 + $0x70] sm:$0xff]
      %v453 = vld [vmem:[%s6 + $0x78] sm:$0xff]
      %v454 = vld [vmem:[%s7] sm:$0x1]
      %v456 = vperm.slane %v454, 0
      %458 = vmatpush.msra.mxu0 %v453
      %459 = vmatpush.msra.mxu0 %v452
      %460 = vmatpush.msra.mxu0 %v451
      %461 = vmatpush.msra.mxu0 %v450
      %462 = vmatpush.msra.mxu0 %v449
      %463 = vmatpush.msra.mxu0 %v448
      %464 = vmatpush.msra.mxu0 %v447
      %465 = vmatpush.msra.mxu0 %v446
      %466 = vmatpush.msra.mxu0 %v445
      %467 = vmatpush.msra.mxu0 %v444
      %468 = vmatpush.msra.mxu0 %v443
      %469 = vmatpush.msra.mxu0 %v442
      %470 = vmatpush.msra.mxu0 %v441
      %471 = vmatpush.msra.mxu0 %v440
      %472 = vmatpush.msra.mxu0 %v439
      %473 = vmatpush.msra.mxu0 %v438
      %474 = vmatmul.f32.gmra.mxu0 %v436
      %v475 = vpop.f32.mrf.mxu0
      %v476 = vadd.f32 %v456, %v475
      %477 = vmatmul.f32.gmra.mxu0 %v437
      %v478 = vpop.f32.mrf.mxu0
      %v479 = vadd.f32 %v456, %v478
      %480 = vdwg.mxu0
      %v481 = vld [vmem:[%s5] sm:$0x1]
      %v483 = vperm.slane %v481, 0
      %v485 = vmul.f32 %v309, %v483
      %v486 = vmul.f32 %v310, %v483
      %487 = vadd.xlane.f32.xlu0 %v485
      %v488 = vpop.xlane.xlu0 %487
      %489 = vadd.xlane.f32.xlu0 %v486
      %v490 = vpop.xlane.xlu0 %489
      %v491 = vlaneseq
      %v492 = vand.u32 %v491, 127
      %vm493 = vcmp.eq.s32.totalorder %v492, 0
      %v494 = vsel %vm493, 1, 0
      %v495 = vcvt.s32.f32 %v494
      %v496 = vmul.f32 %v488, %v495
      %v497 = vmul.f32 %v490, %v495
      %v498 = vadd.f32 %v476, %v496
      %v499 = vadd.f32 %v479, %v497
      %vm500 = vcmask 64512
      %501 = vst.msk [vmem:[%s307] sm:$0xff] %vm500, %v498
      %502 = vst.msk [vmem:[%s307 + $0x8] sm:$0xff] %vm500, %v499
      %s503 = smul.u32 2, %s19
      %p504 = scmp.lt.s32.totalorder %s503, 3
      %s505 = scalar_select %p504, %s503, 3
      %s506 = smul.addr %s505, 8
      %s507 = scalar_lea.vmem %s8, %s506
      // Predicated region
      $region53: #{tpu_custom_call.1} parent=51 // pred_check
        %p508 = pneg %p210
      $region54: #{tpu_custom_call.1} parent=51 // pred_check_branch
        %510 = sbr.rel (%p508) target = $region56
      $region55: #{tpu_custom_call.1} parent=51 // pred_region
        %s511 = smul.u32 2, %s19
      $region56: #{tpu_custom_call.1} parent=51 // pred_fallthru
        _
    $region52: #{tpu_custom_call.1} parent=5 // pred_fallthru
      _
    %p512 = scmp.le.s32.totalorder 2, %s14
    // Predicated region
    $region57: #{tpu_custom_call.1} parent=5 // pred_check
      %p513 = pneg %p512
    $region58: #{tpu_custom_call.1} parent=5 // pred_check_branch
      %515 = sbr.rel (%p513) target = $region60
    $region59: #{tpu_custom_call.1} parent=5 // pred_region
      %s516 = ssub.s32 %s14, 2
      // Predicated region
      $region61: #{tpu_custom_call.1} parent=59 // pred_check
        %p517 = pneg %p216
      $region62: #{tpu_custom_call.1} parent=59 // pred_check_branch
        %519 = sbr.rel (%p517) target = $region64
      $region63: #{tpu_custom_call.1} parent=59 // pred_region
        %s520 = smul.u32 2, %s20
        %p521 = scmp.lt.s32.totalorder %s520, 3
        %s522 = scalar_select %p521, %s520, 3
        %s523 = smul.addr %s522, 8
        %s524 = scalar_lea.vmem %s8, %s523
      $region64: #{tpu_custom_call.1} parent=59 // pred_fallthru
        _
    $region60: #{tpu_custom_call.1} parent=5 // pred_fallthru
      _
  $region6: #{tpu_custom_call.1} parent=0 // loop_footer
    %s18 = sadd.s32 1, %s14
  $region7: #{tpu_custom_call.1} parent=0 // loop_footer_branch
    %13 = sbr.rel target = $region3
  $region8: #{tpu_custom_call.1} parent=0 // loop_exit
    _

</llo_original>
